<compile_context>
chip_gen: v7x
topology: tpu7x:2x2x1
jax: 0.10.0
libtpu: 0.0.40
codegen_flags: <defaults>
</compile_context>

<pallas_src>
import functools

import jax
import jax.numpy as jnp
from jax import lax
from jax.experimental import pallas as pl
from jax.experimental.pallas import tpu as pltpu

_LANES = 128
_SUBLANES = 8


def _round_up(x, m):
    return ((x + m - 1) // m) * m


def _count_loss_kernel(pred_ref, gt_ref, out_ref, acc_sq_ref, acc_rel_ref, *,
                       alpha_over_n, beta_over_n, block_rows, rows_valid,
                       tiles_per_split):
    t = pl.program_id(1)  # reduction axis (last grid axis)

    @pl.when(t == 0)
    def _init():
        acc_sq_ref[...] = jnp.zeros_like(acc_sq_ref)
        acc_rel_ref[...] = jnp.zeros_like(acc_rel_ref)

    # Nominal (unclamped) tile index for this grid step.  Rows at/after
    # `rows_valid` (ragged last block, or duplicate tiles a short split
    # re-reads through the clamped index_map) are masked out here instead of
    # being padded in HBM.
    nominal_tile = pl.program_id(0) * tiles_per_split + t
    row_ids = nominal_tile * block_rows + lax.broadcasted_iota(
        jnp.int32, pred_ref.shape, 0)
    valid = row_ids < rows_valid

    # Cast in-kernel (halves HBM read traffic for bf16 inputs).  Mask BEFORE
    # the arithmetic so garbage rows of a partial block cannot inject inf/nan.
    pred = jnp.where(valid, pred_ref[...].astype(jnp.float32), 0.0)
    gt = jnp.where(valid, gt_ref[...].astype(jnp.float32), 0.0)
    diff = pred - gt

    sq = diff * diff
    # |diff| / (gt + 1)  ->  |diff| * approx-reciprocal (EUP slot, off the
    # VALU critical path; ~1e-3 relative error on the small beta term only).
    rel = jnp.abs(diff) * pl.reciprocal(gt + 1.0, approx=True)

    # (8, 128) vector accumulators: per-step work is pure VPU adds; the single
    # cross-lane/sublane reduce is deferred to the wrapper's tiny jnp.sum.
    acc_sq_ref[...] += sq.reshape(-1, _SUBLANES, _LANES).sum(axis=0)
    acc_rel_ref[...] += rel.reshape(-1, _SUBLANES, _LANES).sum(axis=0)

    @pl.when(t == pl.num_programs(1) - 1)
    def _finalize():
        # Lane-dense (8, 128) per-split output holding the already-scaled
        # partial loss contributions (summed by the wrapper).
        out_ref[...] = (acc_sq_ref[...] * alpha_over_n
                        + acc_rel_ref[...] * beta_over_n)


def improved_count_loss(pred_count, gt_count, alpha=1.0, beta=0.1, *,
                        block_rows=None, num_splits=1,
                        split_semantics="parallel",
                        min_pallas_elems=131072):
    """Pallas equivalent of ImprovedCountLoss.forward. Returns a () f32 scalar."""
    assert pred_count.shape == gt_count.shape
    n = int(pred_count.size)

    if n < min_pallas_elems:
        # Typical count vectors (one count per batch element) are tiny: the
        # pallas_call launch + per-step grid overhead dominates reading a few
        # KB, so let XLA fuse a plain elementwise+reduce instead.
        p = pred_count.astype(jnp.float32).reshape(-1)
        g = gt_count.astype(jnp.float32).reshape(-1)
        d = p - g
        return alpha * jnp.mean(d * d) + beta * jnp.mean(jnp.abs(d) / (g + 1.0))

    pred = pred_count.reshape(-1)
    gt = gt_count.reshape(-1)

    itemsize = jnp.dtype(pred.dtype).itemsize
    sub = {4: 8, 2: 16, 1: 32}.get(itemsize, 8)   # sublane packing granularity

    # Minimal alignment only: pad to the next sub*128 multiple (<= 1023 f32 /
    # 2047 bf16 elements).  When n is already aligned this is a free reshape —
    # no HBM copy.  All block/split-granularity raggedness is masked in-kernel.
    # TODO(synk): a 1-D block layout or manual DMA would avoid the copy for
    # lane-unaligned N as well.
    align = sub * _LANES
    n_pad = _round_up(n, align)
    if n_pad != n:
        pad = n_pad - n
        # Zero padding: diff == 0 and gt + 1 == 1, so padded lanes contribute 0.
        pred = jnp.pad(pred, (0, pad))
        gt = jnp.pad(gt, (0, pad))
    rows = n_pad // _LANES
    pred2d = pred.reshape(rows, _LANES)
    gt2d = gt.reshape(rows, _LANES)

    # ~2 MiB f32 compute footprint per tile (block_rows=4096): past the HBM
    # roofline knee while inputs + f32 intermediates stay well under the
    # explicit 32 MiB VMEM limit on every generation (v5e/v6e/v7x).
    if block_rows is None:
        block_rows = 4096
    block_rows = _round_up(max(sub, min(block_rows, rows)), sub)

    total_tiles = pl.cdiv(rows, block_rows)
    num_splits = max(1, min(num_splits, total_tiles))
    tiles_per_split = pl.cdiv(total_tiles, num_splits)

    kernel = functools.partial(
        _count_loss_kernel,
        alpha_over_n=float(alpha) / n,     # scale by the TRUE element count
        beta_over_n=float(beta) / n,
        block_rows=block_rows,
        rows_valid=rows,
        tiles_per_split=tiles_per_split)

    # Clamp so a short split's trailing steps re-read the last valid tile;
    # their contribution is fully masked to zero in-kernel.
    def in_map(c, t):
        return (jnp.minimum(c * tiles_per_split + t, total_tiles - 1), 0)

    partials = pl.pallas_call(
        kernel,
        out_shape=jax.ShapeDtypeStruct((num_splits * _SUBLANES, _LANES),
                                       jnp.float32),
        grid_spec=pltpu.PrefetchScalarGridSpec(
            num_scalar_prefetch=0,
            grid=(num_splits, tiles_per_split),
            in_specs=[
                pl.BlockSpec((block_rows, _LANES), in_map),
                pl.BlockSpec((block_rows, _LANES), in_map),
            ],
            out_specs=pl.BlockSpec((_SUBLANES, _LANES), lambda c, t: (c, 0)),
            scratch_shapes=[
                pltpu.VMEM((_SUBLANES, _LANES), jnp.float32),  # sum(diff^2)
                pltpu.VMEM((_SUBLANES, _LANES), jnp.float32),  # sum(|d|/(g+1))
            ],
        ),
        compiler_params=pltpu.CompilerParams(
            # On v7x pass num_splits=2 and split_semantics=pltpu.CORE_PARALLEL
            # so both TensorCores stream their half of the rows.
            # TODO(synk): auto-detect the TensorCore count instead of a flag.
            dimension_semantics=(split_semantics, "arbitrary"),
            vmem_limit_bytes=32 * 1024 * 1024),
        cost_estimate=pl.CostEstimate(
            flops=8 * n,
            transcendentals=n,
            bytes_accessed=2 * n * itemsize
            + num_splits * _SUBLANES * _LANES * 4),
    )(pred2d, gt2d)

    # Per-split blocks are already scaled; a tiny XLA reduce over
    # (num_splits*8, 128) finishes the cross-lane/sublane reduction.
    return jnp.sum(partials)


if __name__ == "__main__":
    key = jax.random.PRNGKey(0)
    k1, k2, k3, k4, k5, k6 = jax.random.split(key, 6)

    def reference(pred, gt, alpha=1.0, beta=0.1):
        p = pred.astype(jnp.float32).reshape(-1)
        g = gt.astype(jnp.float32).reshape(-1)
        d = p - g
        return alpha * jnp.mean(d * d) + beta * jnp.mean(jnp.abs(d) / (g + 1.0))

    # --- Pallas path: multi-tile accumulation, ragged (masked) last block,
    #     2-way split whose second half exercises the clamped/masked tiles ---
    n_a = 40 * 128   # rows=40, block_rows=16 -> 3 tiles, last one partial
    pred_a = jax.random.uniform(k1, (n_a,), dtype=jnp.float32) * 10.0
    gt_a = jax.random.uniform(k2, (n_a,), dtype=jnp.float32) * 10.0
    loss_a = jax.block_until_ready(
        improved_count_loss(pred_a, gt_a, alpha=1.0, beta=0.1,
                            block_rows=16, num_splits=2, min_pallas_elems=0))
    ref_a = reference(pred_a, gt_a)
    assert jnp.allclose(loss_a, ref_a, rtol=2e-3, atol=1e-4), (loss_a, ref_a)

    # --- Pallas path: lane-unaligned N (minimal sub*128 pad only) ---
    n_b = 6000
    pred_b = jax.random.uniform(k3, (n_b,), dtype=jnp.float32) * 10.0
    gt_b = jax.random.uniform(k4, (n_b,), dtype=jnp.float32) * 10.0
    loss_b = jax.block_until_ready(
        improved_count_loss(pred_b, gt_b, block_rows=8, min_pallas_elems=0))
    ref_b = reference(pred_b, gt_b)
    assert jnp.allclose(loss_b, ref_b, rtol=2e-3, atol=1e-4), (loss_b, ref_b)

    # --- Pallas path: native bf16 inputs, cast in-kernel, default tiling ---
    n_c = 4096
    pred_c = (jax.random.uniform(k5, (n_c,), dtype=jnp.float32) * 10.0).astype(jnp.bfloat16)
    gt_c = (jax.random.uniform(k6, (n_c,), dtype=jnp.float32) * 10.0).astype(jnp.bfloat16)
    loss_c = jax.block_until_ready(
        improved_count_loss(pred_c, gt_c, min_pallas_elems=0))
    ref_c = reference(pred_c, gt_c)
    assert jnp.allclose(loss_c, ref_c, rtol=2e-3, atol=1e-3), (loss_c, ref_c)

    # --- Default dispatch: large aligned N takes the Pallas path with the
    #     default ~2 MiB tiles, two reduction steps, and zero padding ---
    n_d = 1 << 20
    pred_d = jax.random.uniform(k1, (n_d,), dtype=jnp.float32) * 10.0
    gt_d = jax.random.uniform(k2, (n_d,), dtype=jnp.float32) * 10.0
    loss_d = jax.block_until_ready(improved_count_loss(pred_d, gt_d))
    ref_d = reference(pred_d, gt_d)
    assert jnp.allclose(loss_d, ref_d, rtol=2e-3, atol=1e-4), (loss_d, ref_d)

    # --- Tiny-N dispatch: plain-JAX fallback (the common per-batch-count case) ---
    pred_e = jax.random.uniform(k3, (8,), dtype=jnp.float32) * 10.0
    gt_e = jax.random.uniform(k4, (8,), dtype=jnp.float32) * 10.0
    loss_e = jax.block_until_ready(improved_count_loss(pred_e, gt_e))
    ref_e = reference(pred_e, gt_e)
    assert jnp.allclose(loss_e, ref_e, rtol=1e-5, atol=1e-6), (loss_e, ref_e)

    print("KERNEL_OK")
</pallas_src>

<mosaic_0001>
module attributes {stable_mosaic.version = 11 : i64} {
  func.func @_count_loss_kernel(%arg0: i32, %arg1: i32, %arg2: memref<16x128xf32, #tpu.memory_space<vmem>>, %arg3: memref<16x128xf32, #tpu.memory_space<vmem>>, %arg4: memref<8x128xf32, #tpu.memory_space<vmem>>, %arg5: memref<8x128xf32, #tpu.memory_space<vmem>>, %arg6: memref<8x128xf32, #tpu.memory_space<vmem>>) attributes {dimension_semantics = [#tpu.dimension_semantics<parallel>, #tpu.dimension_semantics<arbitrary>], iteration_bounds = array<i64: 2, 2>, scalar_prefetch = 0 : i64, scratch_operands = 2 : i64, tpu.core_type = #tpu.core_type<tc>, window_params = [{transform_indices = @transform_0, window_bounds = array<i64: 16, 128>}, {transform_indices = @transform_1, window_bounds = array<i64: 16, 128>}, {transform_indices = @transform_2, window_bounds = array<i64: 8, 128>}]} {
    %c0_i32 = arith.constant 0 : i32
    %0 = arith.cmpi eq, %arg1, %c0_i32 : i32
    %1 = arith.extui %0 : i1 to i32
    %c0_i32_0 = arith.constant 0 : i32
    %2 = arith.cmpi ne, %1, %c0_i32_0 : i32
    scf.if %2 {
      %cst_17 = arith.constant 0.000000e+00 : f32
      %37 = vector.broadcast %cst_17 : f32 to vector<8x128xf32>
      %c0_18 = arith.constant 0 : index
      %c0_19 = arith.constant 0 : index
      %38 = vector.load %arg5[%c0_18, %c0_19] : memref<8x128xf32, #tpu.memory_space<vmem>>, vector<8x128xf32>
      tpu.vector_store %arg5[%c0_18, %c0_19], %37 {strides = array<i32>} : memref<8x128xf32, #tpu.memory_space<vmem>>, vector<8x128xf32>,
      %cst_20 = arith.constant 0.000000e+00 : f32
      %39 = vector.broadcast %cst_20 : f32 to vector<8x128xf32>
      %c0_21 = arith.constant 0 : index
      %c0_22 = arith.constant 0 : index
      %40 = vector.load %arg6[%c0_21, %c0_22] : memref<8x128xf32, #tpu.memory_space<vmem>>, vector<8x128xf32>
      tpu.vector_store %arg6[%c0_21, %c0_22], %39 {strides = array<i32>} : memref<8x128xf32, #tpu.memory_space<vmem>>, vector<8x128xf32>,
    } else {
    }
    %c2_i32 = arith.constant 2 : i32
    %3 = arith.muli %arg0, %c2_i32 : i32
    %4 = arith.addi %3, %arg1 : i32
    %c16_i32 = arith.constant 16 : i32
    %5 = arith.muli %4, %c16_i32 : i32
    %6 = tpu.iota {dimensions = array<i32: 0>} : vector<16x128xi32>
    %7 = vector.broadcast %5 : i32 to vector<16x128xi32>
    %8 = arith.addi %7, %6 : vector<16x128xi32>
    %c40_i32 = arith.constant 40 : i32
    %9 = vector.broadcast %c40_i32 : i32 to vector<16x128xi32>
    %10 = arith.cmpi slt, %8, %9 : vector<16x128xi32>
    %c0 = arith.constant 0 : index
    %c0_1 = arith.constant 0 : index
    %11 = vector.load %arg2[%c0, %c0_1] : memref<16x128xf32, #tpu.memory_space<vmem>>, vector<16x128xf32>
    %cst = arith.constant 0.000000e+00 : f32
    %12 = vector.broadcast %cst : f32 to vector<16x128xf32>
    %13 = arith.select %10, %11, %12 : vector<16x128xi1>, vector<16x128xf32>
    %c0_2 = arith.constant 0 : index
    %c0_3 = arith.constant 0 : index
    %14 = vector.load %arg3[%c0_2, %c0_3] : memref<16x128xf32, #tpu.memory_space<vmem>>, vector<16x128xf32>
    %cst_4 = arith.constant 0.000000e+00 : f32
    %15 = vector.broadcast %cst_4 : f32 to vector<16x128xf32>
    %16 = arith.select %10, %14, %15 : vector<16x128xi1>, vector<16x128xf32>
    %17 = arith.subf %13, %16 : vector<16x128xf32>
    %18 = arith.mulf %17, %17 : vector<16x128xf32>
    %19 = math.absf %17 : vector<16x128xf32>
    %cst_5 = arith.constant 1.000000e+00 : f32
    %20 = vector.broadcast %cst_5 : f32 to vector<16x128xf32>
    %21 = arith.addf %16, %20 : vector<16x128xf32>
    %22 = tpu.reciprocal %21 {approx = true} : vector<16x128xf32> -> vector<16x128xf32>
    %23 = arith.mulf %19, %22 : vector<16x128xf32>
    %c0_6 = arith.constant 0 : index
    %c0_7 = arith.constant 0 : index
    %24 = vector.load %arg5[%c0_6, %c0_7] : memref<8x128xf32, #tpu.memory_space<vmem>>, vector<8x128xf32>
    %25 = vector.shape_cast %18 : vector<16x128xf32> to vector<2x8x128xf32>
    %cst_8 = arith.constant dense<0.000000e+00> : vector<8x128xf32>
    %26 = vector.multi_reduction <add>, %25, %cst_8 [0] : vector<2x8x128xf32> to vector<8x128xf32>
    %27 = arith.addf %24, %26 : vector<8x128xf32>
    %c0_9 = arith.constant 0 : index
    %c0_10 = arith.constant 0 : index
    %28 = vector.load %arg5[%c0_9, %c0_10] : memref<8x128xf32, #tpu.memory_space<vmem>>, vector<8x128xf32>
    tpu.vector_store %arg5[%c0_9, %c0_10], %27 {strides = array<i32>} : memref<8x128xf32, #tpu.memory_space<vmem>>, vector<8x128xf32>,
    %c0_11 = arith.constant 0 : index
    %c0_12 = arith.constant 0 : index
    %29 = vector.load %arg6[%c0_11, %c0_12] : memref<8x128xf32, #tpu.memory_space<vmem>>, vector<8x128xf32>
    %30 = vector.shape_cast %23 : vector<16x128xf32> to vector<2x8x128xf32>
    %cst_13 = arith.constant dense<0.000000e+00> : vector<8x128xf32>
    %31 = vector.multi_reduction <add>, %30, %cst_13 [0] : vector<2x8x128xf32> to vector<8x128xf32>
    %32 = arith.addf %29, %31 : vector<8x128xf32>
    %c0_14 = arith.constant 0 : index
    %c0_15 = arith.constant 0 : index
    %33 = vector.load %arg6[%c0_14, %c0_15] : memref<8x128xf32, #tpu.memory_space<vmem>>, vector<8x128xf32>
    tpu.vector_store %arg6[%c0_14, %c0_15], %32 {strides = array<i32>} : memref<8x128xf32, #tpu.memory_space<vmem>>, vector<8x128xf32>,
    %c1_i32 = arith.constant 1 : i32
    %34 = arith.cmpi eq, %arg1, %c1_i32 : i32
    %35 = arith.extui %34 : i1 to i32
    %c0_i32_16 = arith.constant 0 : i32
    %36 = arith.cmpi ne, %35, %c0_i32_16 : i32
    scf.if %36 {
      %c0_17 = arith.constant 0 : index
      %c0_18 = arith.constant 0 : index
      %37 = vector.load %arg5[%c0_17, %c0_18] : memref<8x128xf32, #tpu.memory_space<vmem>>, vector<8x128xf32>
      %cst_19 = arith.constant 1.95312503E-4 : f32
      %38 = vector.broadcast %cst_19 : f32 to vector<8x128xf32>
      %39 = arith.mulf %37, %38 : vector<8x128xf32>
      %c0_20 = arith.constant 0 : index
      %c0_21 = arith.constant 0 : index
      %40 = vector.load %arg6[%c0_20, %c0_21] : memref<8x128xf32, #tpu.memory_space<vmem>>, vector<8x128xf32>
      %cst_22 = arith.constant 1.95312496E-5 : f32
      %41 = vector.broadcast %cst_22 : f32 to vector<8x128xf32>
      %42 = arith.mulf %40, %41 : vector<8x128xf32>
      %43 = arith.addf %39, %42 : vector<8x128xf32>
      %c0_23 = arith.constant 0 : index
      %c0_24 = arith.constant 0 : index
      %44 = vector.load %arg4[%c0_23, %c0_24] : memref<8x128xf32, #tpu.memory_space<vmem>>, vector<8x128xf32>
      tpu.vector_store %arg4[%c0_23, %c0_24], %43 {strides = array<i32>} : memref<8x128xf32, #tpu.memory_space<vmem>>, vector<8x128xf32>,
    } else {
    }
    return
  }
  func.func @transform_0(%arg0: i32, %arg1: i32) -> (i32, i32) {
    %c2_i32 = arith.constant 2 : i32
    %0 = arith.muli %arg0, %c2_i32 : i32
    %1 = arith.addi %0, %arg1 : i32
    %c2_i32_0 = arith.constant 2 : i32
    %2 = arith.minsi %1, %c2_i32_0 : i32
    %c0_i32 = arith.constant 0 : i32
    %c0_i32_1 = arith.constant 0 : i32
    return %2, %c0_i32 : i32, i32
  }
  func.func @transform_1(%arg0: i32, %arg1: i32) -> (i32, i32) {
    %c2_i32 = arith.constant 2 : i32
    %0 = arith.muli %arg0, %c2_i32 : i32
    %1 = arith.addi %0, %arg1 : i32
    %c2_i32_0 = arith.constant 2 : i32
    %2 = arith.minsi %1, %c2_i32_0 : i32
    %c0_i32 = arith.constant 0 : i32
    %c0_i32_1 = arith.constant 0 : i32
    return %2, %c0_i32 : i32, i32
  }
  func.func @transform_2(%arg0: i32, %arg1: i32) -> (i32, i32) {
    %c0_i32 = arith.constant 0 : i32
    %c0_i32_0 = arith.constant 0 : i32
    return %arg0, %c0_i32 : i32, i32
  }
}

</mosaic_0001>

<llo_original>
// kernel: tpu_custom_call.1
$region0: #{tpu_custom_call.1}
  #allocation0 [shape = 'u32[]', space=smem, size = 0x4, offset = 0x4, fixed_abs, tag = 'smem constant byte address 0x4 - core index']
  #allocation1 [shape = 'u32[144,128]{1,0:T(1,128)}', space=vmem, size = 0x12000, scoped, tag = 'internal scratch']
  #allocation2 [shape = 'f32[8,128]{1,0:T(8,128)}', space=vmem, size = 0x1000, scoped, tag = 'scratch operand']
  #allocation3 [shape = 'f32[8,128]{1,0:T(8,128)}', space=vmem, size = 0x1000, scoped, tag = 'scratch operand']
  %s0 = inlined_call_operand.hbm [shape: f32[40,128], index: 0, kind: input, shape index: {}]
  %s1 = inlined_call_operand.hbm [shape: f32[40,128], index: 1, kind: input, shape index: {}]
  %s2 = inlined_call_operand.hbm [shape: f32[16,128], index: 2, kind: output, shape index: {}]
  %s3 = sld [smem:[#allocation0]]
  $region57: #{tpu_custom_call.1} parent=0
    _
  %s5 = ssub.s32 1, %s3
  %s6 = scalar_select 0, %s5, %s3
  $region1: #{tpu_custom_call.1} parent=0
    #allocation4 [shape = 'u8[16384]{0}', space=vmem, size = 0x4000, scoped, tag = 'input window, operand 0']
    #allocation5 [shape = 's32[2]{0}', space=sflag, size = 0x8, scoped, tag = 'scoped memory for tpu_custom_call.1']
    #allocation6 [shape = 's32[2]{0}', space=sflag, size = 0x8, scoped, tag = 'scoped memory for tpu_custom_call.1']
    #allocation7 [shape = 'u8[16384]{0}', space=vmem, size = 0x4000, scoped, tag = 'input window, operand 1']
    #allocation8 [shape = 's32[2]{0}', space=sflag, size = 0x8, scoped, tag = 'scoped memory for tpu_custom_call.1']
    #allocation9 [shape = 'u8[8192]{0}', space=vmem, size = 0x2000, scoped, tag = 'output window, operand 0']
    %7 = vsyncpa [#allocation5], 0
    %s8 = scalar_lea.sflag [#allocation5], 1
    %9 = vsyncpa %s8, 0
    %10 = vsyncpa [#allocation8], 0
    %s11 = scalar_lea.sflag [#allocation8], 1
    %12 = vsyncpa %s11, 0
    %13 = vsyncpa [#allocation6], 0
    %s14 = scalar_lea.sflag [#allocation6], 1
    %15 = vsyncpa %s14, 0
    loop: start=0, step=1, limit=6
    $region2: #{tpu_custom_call.1} parent=1 // loop_pre_header
      _
    $region3: #{tpu_custom_call.1} parent=1 // loop_header
      %s17 = sphi 0, %s21
      %p18 = scmp.ge.s32.totalorder %s17, 6
      %s24 = sphi 0, %s36
      %s25 = sphi 0, %s32
      %s26 = sphi 0, %s24
      %s27 = sphi 0, %s25
      %s28 = sphi 0, %s26
      %s29 = sphi 0, %s27
      %s47 = sphi 0, %s49
      %s50 = sphi 0, %s47
      %s51 = sphi 0, %s50
      %s67 = sphi 0, %s51
      %s81 = sphi 0, %s83
      %s84 = sphi 0, %s81
      %s85 = sphi 0, %s84
      %s101 = sphi 0, %s85
      %s107 = sphi 0, %s109
      %s110 = sphi 0, %s107
      %s111 = sphi 0, %s110
      %s127 = sphi 0, %s111
    $region4: #{tpu_custom_call.1} parent=1 // loop_header_branch
      %20 = sbr.rel (%p18) target = $region8
    $region5: #{tpu_custom_call.1} parent=1 // loop_body
      %s22 = ssub.s32 %s17, 1
      %s23 = ssub.s32 %s17, 2
      %s30 = sadd.s32 1, %s25
      %p31 = scmp.ge.s32.totalorder %s30, 2
      %s32 = scalar_select %p31, 0, %s30
      %s33 = sadd.s32 1, %s24
      %s34 = scalar_select %p31, %s33, %s24
      %p35 = scmp.ge.s32.totalorder %s34, 2
      %s36 = scalar_select %p35, 0, %s34
      %s37 = smul.u32 %s24, 2
      %s38 = sadd.s32 %s37, %s25
      %p39 = scmp.lt.s32.totalorder %s38, 2
      %s40 = scalar_select %p39, %s38, 2
      %s41 = smul.u32 %s36, 2
      %s42 = sadd.s32 %s41, %s32
      %p43 = scmp.lt.s32.totalorder %s42, 2
      %s44 = scalar_select %p43, %s42, 2
      %s45 = ssub.s32 %s40, %s44
      %p46 = scmp.eq.s32.totalorder %s45, 0
      %s48 = sadd.s32 %s47, 1
      %s49 = scalar_select %p46, %s47, %s48
      %p52 = pneg %p46
      %p53 = scmp.eq.s32.totalorder %s17, 3
      %p54 = por %p52, %p53
      %p55 = scmp.ne.s32.totalorder %s47, %s50
      %p56 = scmp.eq.s32.totalorder %s17, 0
      %p57 = por %p55, %p56
      %p58 = scmp.ne.s32.totalorder %s47, %s50
      %p59 = scmp.eq.s32.totalorder %s22, 3
      %p60 = por %p58, %p59
      %p61 = scmp.ne.s32.totalorder %s50, %s51
      %p62 = scmp.eq.s32.totalorder %s22, 0
      %p63 = por %p61, %p62
      %p64 = scmp.ne.s32.totalorder %s50, %s51
      %p65 = scmp.eq.s32.totalorder %s23, 3
      %p66 = por %p64, %p65
      %p68 = scmp.ne.s32.totalorder %s51, %s67
      %p69 = scmp.eq.s32.totalorder %s23, 0
      %p70 = por %p68, %p69
      %s71 = smul.u32 %s24, 2
      %s72 = sadd.s32 %s71, %s25
      %p73 = scmp.lt.s32.totalorder %s72, 2
      %s74 = scalar_select %p73, %s72, 2
      %s75 = smul.u32 %s36, 2
      %s76 = sadd.s32 %s75, %s32
      %p77 = scmp.lt.s32.totalorder %s76, 2
      %s78 = scalar_select %p77, %s76, 2
      %s79 = ssub.s32 %s74, %s78
      %p80 = scmp.eq.s32.totalorder %s79, 0
      %s82 = sadd.s32 %s81, 1
      %s83 = scalar_select %p80, %s81, %s82
      %p86 = pneg %p80
      %p87 = scmp.eq.s32.totalorder %s17, 3
      %p88 = por %p86, %p87
      %p89 = scmp.ne.s32.totalorder %s81, %s84
      %p90 = scmp.eq.s32.totalorder %s17, 0
      %p91 = por %p89, %p90
      %p92 = scmp.ne.s32.totalorder %s81, %s84
      %p93 = scmp.eq.s32.totalorder %s22, 3
      %p94 = por %p92, %p93
      %p95 = scmp.ne.s32.totalorder %s84, %s85
      %p96 = scmp.eq.s32.totalorder %s22, 0
      %p97 = por %p95, %p96
      %p98 = scmp.ne.s32.totalorder %s84, %s85
      %p99 = scmp.eq.s32.totalorder %s23, 3
      %p100 = por %p98, %p99
      %p102 = scmp.ne.s32.totalorder %s85, %s101
      %p103 = scmp.eq.s32.totalorder %s23, 0
      %p104 = por %p102, %p103
      %s105 = ssub.s32 %s24, %s36
      %p106 = scmp.eq.s32.totalorder %s105, 0
      %s108 = sadd.s32 %s107, 1
      %s109 = scalar_select %p106, %s107, %s108
      %p112 = pneg %p106
      %p113 = scmp.eq.s32.totalorder %s17, 3
      %p114 = por %p112, %p113
      %p115 = scmp.ne.s32.totalorder %s107, %s110
      %p116 = scmp.eq.s32.totalorder %s17, 0
      %p117 = por %p115, %p116
      %p118 = scmp.ne.s32.totalorder %s107, %s110
      %p119 = scmp.eq.s32.totalorder %s22, 3
      %p120 = por %p118, %p119
      %p121 = scmp.ne.s32.totalorder %s110, %s111
      %p122 = scmp.eq.s32.totalorder %s22, 0
      %p123 = por %p121, %p122
      %p124 = scmp.ne.s32.totalorder %s110, %s111
      %p125 = scmp.eq.s32.totalorder %s23, 3
      %p126 = por %p124, %p125
      %p128 = scmp.ne.s32.totalorder %s111, %s127
      %p129 = scmp.eq.s32.totalorder %s23, 0
      %p130 = por %p128, %p129
      %p131 = scmp.le.s32.totalorder 1, %s17
      %p132 = scmp.lt.s32.totalorder %s17, 5
      %p133 = pnand %p131, %p132
      %p134 = pneg %p133
      // Predicated region
      $region9: #{tpu_custom_call.1} parent=5 // pred_check
        _
      $region10: #{tpu_custom_call.1} parent=5 // pred_check_branch
        %136 = sbr.rel (%p133) target = $region12
      $region11: #{tpu_custom_call.1} parent=5 // pred_region
        %s137 = ssub.s32 %s17, 1
      $region12: #{tpu_custom_call.1} parent=5 // pred_fallthru
        _
      %p138 = scmp.lt.s32.totalorder %s17, 4
      // Predicated region
      $region13: #{tpu_custom_call.1} parent=5 // pred_check
        %p139 = pneg %p138
      $region14: #{tpu_custom_call.1} parent=5 // pred_check_branch
        %141 = sbr.rel (%p139) target = $region16
      $region15: #{tpu_custom_call.1} parent=5 // pred_region
        // Predicated region
        $region17: #{tpu_custom_call.1} parent=15 // pred_check
          %p142 = pneg %p57
        $region18: #{tpu_custom_call.1} parent=15 // pred_check_branch
          %144 = sbr.rel (%p142) target = $region20
        $region19: #{tpu_custom_call.1} parent=15 // pred_region
          %s145 = sand.u32 %s47, 1
          %s146 = scalar_lea.sflag [#allocation5], %s145
          %s147 = sand.u32 %s47, 1
          %s148 = smul.addr %s147, 16
          %s149 = scalar_lea.vmem [#allocation4], %s148
          %s150 = smul.u32 %s24, 2
          %s151 = sadd.s32 %s150, %s25
          %p152 = scmp.lt.s32.totalorder %s151, 2
          %s153 = scalar_select %p152, %s151, 2
          %s154 = smul.u32 2, %s153
          %s155 = ssub.s32 5, %s154
          %p156 = scmp.lt.s32.totalorder %s155, 2
          %s157 = scalar_select %p156, %s155, 2
          %s158 = smul.u32 128, %s157
          %s160 = ssub.s32 256, %s158
          %161 = vsyncadd %s146, %s160
          %p162 = scmp.ne.s32.totalorder 0, %s158
          %s163 = smul.addr %s154, 128
          %s164 = scalar_lea.hbm %s0, %s163
          %s165 = smul.u32 8, %s157
          %s166 = sshll.u32 %s149, 4
          %s167 = int_to_ptr.vmem [resolvable:$true] %s166
          %s168 = sshll.u32 %s165, 4
          %172 = dma.hbm_to_vmem [thread:$0]  (%p162), %s164, %s168, %s167, %s146, 128, 128, 8
        $region20: #{tpu_custom_call.1} parent=15 // pred_fallthru
          _
        // Predicated region
        $region21: #{tpu_custom_call.1} parent=15 // pred_check
          %p173 = pneg %p91
        $region22: #{tpu_custom_call.1} parent=15 // pred_check_branch
          %175 = sbr.rel (%p173) target = $region24
        $region23: #{tpu_custom_call.1} parent=15 // pred_region
          %s176 = sand.u32 %s81, 1
          %s177 = scalar_lea.sflag [#allocation8], %s176
          %s178 = sand.u32 %s81, 1
          %s179 = smul.addr %s178, 16
          %s180 = scalar_lea.vmem [#allocation7], %s179
          %s181 = smul.u32 %s24, 2
          %s182 = sadd.s32 %s181, %s25
          %p183 = scmp.lt.s32.totalorder %s182, 2
          %s184 = scalar_select %p183, %s182, 2
          %s185 = smul.u32 2, %s184
          %s186 = ssub.s32 5, %s185
          %p187 = scmp.lt.s32.totalorder %s186, 2
          %s188 = scalar_select %p187, %s186, 2
          %s189 = smul.u32 128, %s188
          %s191 = ssub.s32 256, %s189
          %192 = vsyncadd %s177, %s191
          %p193 = scmp.ne.s32.totalorder 0, %s189
          %s194 = smul.addr %s185, 128
          %s195 = scalar_lea.hbm %s1, %s194
          %s196 = smul.u32 8, %s188
          %s197 = sshll.u32 %s180, 4
          %s198 = int_to_ptr.vmem [resolvable:$true] %s197
          %s199 = sshll.u32 %s196, 4
          %203 = dma.hbm_to_vmem [thread:$0]  (%p193), %s195, %s199, %s198, %s177, 128, 128, 8
        $region24: #{tpu_custom_call.1} parent=15 // pred_fallthru
          _
      $region16: #{tpu_custom_call.1} parent=5 // pred_fallthru
        _
      %p204 = scmp.le.s32.totalorder 1, %s17
      %p205 = scmp.lt.s32.totalorder %s17, 5
      %p206 = pnand %p204, %p205
      %p207 = pneg %p206
      // Predicated region
      $region25: #{tpu_custom_call.1} parent=5 // pred_check
        _
      $region26: #{tpu_custom_call.1} parent=5 // pred_check_branch
        %209 = sbr.rel (%p206) target = $region28
      $region27: #{tpu_custom_call.1} parent=5 // pred_region
        %s210 = ssub.s32 %s17, 1
        %s211 = sand.u32 %s50, 1
        %s212 = scalar_lea.sflag [#allocation5], %s211
        %s213 = sand.u32 %s50, 1
        %s214 = smul.addr %s213, 16
        %s215 = scalar_lea.vmem [#allocation4], %s214
        // Predicated region
        $region29: #{tpu_custom_call.1} parent=27 // pred_check
          %p216 = pneg %p63
        $region30: #{tpu_custom_call.1} parent=27 // pred_check_branch
          %218 = sbr.rel (%p216) target = $region32
        $region31: #{tpu_custom_call.1} parent=27 // pred_region
          %219 = dma.done %s212, 256
        $region32: #{tpu_custom_call.1} parent=27 // pred_fallthru
          _
        %s220 = sand.u32 %s84, 1
        %s221 = scalar_lea.sflag [#allocation8], %s220
        %s222 = sand.u32 %s84, 1
        %s223 = smul.addr %s222, 16
        %s224 = scalar_lea.vmem [#allocation7], %s223
        // Predicated region
        $region33: #{tpu_custom_call.1} parent=27 // pred_check
          %p225 = pneg %p97
        $region34: #{tpu_custom_call.1} parent=27 // pred_check_branch
          %227 = sbr.rel (%p225) target = $region36
        $region35: #{tpu_custom_call.1} parent=27 // pred_region
          %228 = dma.done %s221, 256
        $region36: #{tpu_custom_call.1} parent=27 // pred_fallthru
          _
        %s229 = sand.u32 %s50, 1
        %s230 = scalar_lea.sflag [#allocation5], %s229
        %s231 = sand.u32 %s50, 1
        %s232 = smul.addr %s231, 16
        %s233 = scalar_lea.vmem [#allocation4], %s232
        %p234 = pneg %p63
        %p235 = pneg %p60
        %s236 = sand.u32 %s84, 1
        %s237 = scalar_lea.sflag [#allocation8], %s236
        %s238 = sand.u32 %s84, 1
        %s239 = smul.addr %s238, 16
        %s240 = scalar_lea.vmem [#allocation7], %s239
        %p241 = pneg %p97
        %p242 = pneg %p94
        %p243 = pneg %p123
        %p244 = pneg %p120
        %s245 = sand.u32 %s110, 1
        %s246 = scalar_lea.sflag [#allocation6], %s245
        %s247 = sand.u32 %s110, 1
        %s248 = smul.addr %s247, 8
        %s249 = scalar_lea.vmem [#allocation9], %s248
        %s250 = smul.u32 %s26, 2
        %s251 = sadd.s32 %s250, %s27
        %p252 = scmp.lt.s32.totalorder %s251, 2
        %s253 = scalar_select %p252, %s251, 2
        %s254 = smul.u32 2, %s253
        %s255 = ssub.s32 5, %s254
        %p256 = scmp.lt.s32.totalorder %s255, 2
        %s257 = scalar_select %p256, %s255, 2
        %s258 = smul.u32 128, %s257
        %s259 = smul.u32 %s26, 2
        %s260 = sadd.s32 %s259, %s27
        %p261 = scmp.lt.s32.totalorder %s260, 2
        %s262 = scalar_select %p261, %s260, 2
        %s263 = smul.u32 2, %s262
        %s264 = ssub.s32 5, %s263
        %p265 = scmp.lt.s32.totalorder %s264, 2
        %s266 = scalar_select %p265, %s264, 2
        %s267 = smul.u32 128, %s266
        %p268 = scmp.eq.s32.totalorder %s27, 0
        // Predicated region
        $region37: #{tpu_custom_call.1} parent=27 // pred_check
          %p269 = pneg %p268
        $region38: #{tpu_custom_call.1} parent=27 // pred_check_branch
          %271 = sbr.rel (%p269) target = $region40
        $region39: #{tpu_custom_call.1} parent=27 // pred_region
          %272 = vst [vmem:[#allocation2] sm:$0xff] 0.0
          %273 = vst [vmem:[#allocation3] sm:$0xff] 0.0
        $region40: #{tpu_custom_call.1} parent=27 // pred_fallthru
          _
        %s274 = smul.u32 %s26, 2
        %s275 = sadd.s32 %s274, %s27
        %s276 = smul.u32 %s275, 16
        %v277 = vlaneseq
        %v278 = vshrl.u32 %v277, 7
        %v279 = vadd.s32 %v278, 8
        %v280 = vstv %s276
        %v281 = vadd.s32 %v280, %v278
        %v282 = vadd.s32 %v280, %v279
        %vm283 = vcmp.lt.s32.totalorder %v281, 40
        %vm284 = vcmp.lt.s32.totalorder %v282, 40
        %v285 = vld [vmem:[%s215] sm:$0xff]
        %v286 = vld [vmem:[%s215 + $0x8] sm:$0xff]
        %v287 = vsel %vm283, %v285, 0.0
        %v288 = vsel %vm284, %v286, 0.0
        %v289 = vld [vmem:[%s224] sm:$0xff]
        %v290 = vld [vmem:[%s224 + $0x8] sm:$0xff]
        %v291 = vsel %vm283, %v289, 0.0
        %v292 = vsel %vm284, %v290, 0.0
        %v293 = vsub.f32 %v287, %v291
        %v294 = vsub.f32 %v288, %v292
        %v295 = vmul.f32 %v293, %v293
        %v296 = vmul.f32 %v294, %v294
        %v297 = vand.u32 2147483647, %v293
        %v298 = vand.u32 2147483647, %v294
        %v299 = vadd.f32 %v291, 1.0
        %v300 = vadd.f32 %v292, 1.0
        %v301 = vrcp.pop %v299
        %v302 = vrcp.pop %v300
        %v303 = vmul.f32 %v297, %v301
        %v304 = vmul.f32 %v298, %v302
        %v305 = vld [vmem:[#allocation2] sm:$0xff]
        %v306 = vadd.f32 %v295, %v296
        %v307 = vadd.f32 %v305, %v306
        %308 = vst [vmem:[#allocation2] sm:$0xff] %v307
        %v309 = vld [vmem:[#allocation3] sm:$0xff]
        %v310 = vadd.f32 %v303, %v304
        %v311 = vadd.f32 %v309, %v310
        %312 = vst [vmem:[#allocation3] sm:$0xff] %v311
        %p313 = scmp.eq.s32.totalorder %s27, 1
        // Predicated region
        $region41: #{tpu_custom_call.1} parent=27 // pred_check
          %p314 = pneg %p313
        $region42: #{tpu_custom_call.1} parent=27 // pred_check_branch
          %316 = sbr.rel (%p314) target = $region44
        $region43: #{tpu_custom_call.1} parent=27 // pred_region
          %v317 = vld [vmem:[#allocation2] sm:$0xff]
          %v318 = vmul.f32 %v317, 0.0001953125
          %v319 = vld [vmem:[#allocation3] sm:$0xff]
          %v320 = vmul.f32 %v319, 1.953125e-05
          %v321 = vadd.f32 %v318, %v320
          %322 = vst [vmem:[%s249] sm:$0xff] %v321
        $region44: #{tpu_custom_call.1} parent=27 // pred_fallthru
          _
        %s323 = sand.u32 %s110, 1
        %s324 = scalar_lea.sflag [#allocation6], %s323
        %s325 = sand.u32 %s110, 1
        %s326 = smul.addr %s325, 8
        %s327 = scalar_lea.vmem [#allocation9], %s326
        // Predicated region
        $region45: #{tpu_custom_call.1} parent=27 // pred_check
          %p328 = pneg %p120
        $region46: #{tpu_custom_call.1} parent=27 // pred_check_branch
          %330 = sbr.rel (%p328) target = $region48
        $region47: #{tpu_custom_call.1} parent=27 // pred_region
          %s332 = ssub.s32 128, 128
          %333 = vsyncadd %s324, %s332
          %s334 = smul.addr %s26, 128
          %s335 = scalar_lea.hbm %s2, %s334
          %s337 = sshll.u32 %s327, 4
          %s338 = int_to_ptr.vmem [resolvable:$true] %s337
          %340 = dma.vmem_to_hbm [thread:$0]  %s338, 128, %s335, %s324
        $region48: #{tpu_custom_call.1} parent=27 // pred_fallthru
          _
      $region28: #{tpu_custom_call.1} parent=5 // pred_fallthru
        _
      %p341 = scmp.le.s32.totalorder 2, %s17
      // Predicated region
      $region49: #{tpu_custom_call.1} parent=5 // pred_check
        %p342 = pneg %p341
      $region50: #{tpu_custom_call.1} parent=5 // pred_check_branch
        %344 = sbr.rel (%p342) target = $region52
      $region51: #{tpu_custom_call.1} parent=5 // pred_region
        %s345 = ssub.s32 %s17, 2
        // Predicated region
        $region53: #{tpu_custom_call.1} parent=51 // pred_check
          %p346 = pneg %p126
        $region54: #{tpu_custom_call.1} parent=51 // pred_check_branch
          %348 = sbr.rel (%p346) target = $region56
        $region55: #{tpu_custom_call.1} parent=51 // pred_region
          %s349 = sand.u32 %s111, 1
          %s350 = scalar_lea.sflag [#allocation6], %s349
          %s351 = sand.u32 %s111, 1
          %s352 = smul.addr %s351, 8
          %s353 = scalar_lea.vmem [#allocation9], %s352
          %354 = dma.done %s350, 128
        $region56: #{tpu_custom_call.1} parent=51 // pred_fallthru
          _
      $region52: #{tpu_custom_call.1} parent=5 // pred_fallthru
        _
    $region6: #{tpu_custom_call.1} parent=1 // loop_footer
      %s21 = sadd.s32 1, %s17
    $region7: #{tpu_custom_call.1} parent=1 // loop_footer_branch
      %16 = sbr.rel target = $region3
    $region8: #{tpu_custom_call.1} parent=1 // loop_exit
      _
    %355 = vsyncpa [#allocation5], 1
    %s356 = scalar_lea.sflag [#allocation5], 1
    %357 = vsyncpa %s356, 1
    %358 = vsyncpa [#allocation8], 1
    %s359 = scalar_lea.sflag [#allocation8], 1
    %360 = vsyncpa %s359, 1
    %361 = vsyncpa [#allocation6], 1
    %s362 = scalar_lea.sflag [#allocation6], 1
    %363 = vsyncpa %s362, 1

</llo_original>
